<compile_context>
chip_gen: v7x
topology: tpu7x:2x2x1
jax: 0.10.0
libtpu: 0.0.40
codegen_flags: <defaults>
</compile_context>

<pallas_src>
import jax
import jax.numpy as jnp
from jax.experimental import pallas as pl
from jax.experimental.pallas import tpu as pltpu

LANE = 128
TM_MAX = 4096  # 4096 * 128 * 4B = 2 MiB per input per block.


def _make_dice_partials_kernel(n_rows: int, tm: int, needs_mask: bool):
    """Kernel producing per-(class, batch-group) per-lane partial sums."""

    def kernel(x_ref, t_ref, i_ref, xs_ref, ts_ref):
        ti = pl.program_id(2)

        # Zero the (VMEM-resident) output accumulators at the first tile.
        @pl.when(ti == 0)
        def _():
            i_ref[...] = jnp.zeros_like(i_ref)
            xs_ref[...] = jnp.zeros_like(xs_ref)
            ts_ref[...] = jnp.zeros_like(ts_ref)

        # Block is (TB, TM, 128) or (TM, 128); collapse leading dims (free).
        x = x_ref[...].astype(jnp.float32).reshape(-1, LANE)
        t = t_ref[...].astype(jnp.float32).reshape(-1, LANE)

        if needs_mask:
            # Last row-tile can run past the real row count; zero those rows.
            row = jax.lax.broadcasted_iota(jnp.int32, x.shape, 0)
            valid = (row + ti * tm) < n_rows
            x = jnp.where(valid, x, 0.0)
            t = jnp.where(valid, t, 0.0)

        def part(a):
            # Pure VPU vreg adds when the row count is sublane-aligned;
            # cross-lane / cross-sublane reduces are deferred to the wrapper.
            r = a.shape[0]
            if r % 8 == 0:
                return a.reshape(r // 8, 8, LANE).sum(axis=0)  # (8, 128)
            return a.sum(axis=0, keepdims=True)                # (1, 128)

        i_ref[...] += part(x * t)   # intersection partials
        xs_ref[...] += part(x)      # inputs.sum() partials
        ts_ref[...] += part(t)      # targets.sum() partials

    return kernel


def dice_loss_pallas(inputs, targets, smooth: float = 1.0):
    """DiceLoss.forward: sum over classes of per-class dice loss.

    inputs, targets: (B, C, D, H, W) arrays (NCDHW, as in PyTorch).
    Returns a float32 scalar.
    """
    assert inputs.shape == targets.shape and inputs.ndim == 5
    B, C, D, H, W = inputs.shape
    S = D * H * W
    smooth = float(smooth)

    def prep(a):
        a = a.reshape(B, C, S)  # contiguous -> free
        if S % LANE != 0:
            # TODO(synk): handle the <128-element tail in-kernel (global
            # element-index mask) to avoid this extra HBM read+write for
            # non-128-divisible spatial volumes.
            a = jnp.pad(a, ((0, 0), (0, 0), (0, (-S) % LANE)))
        return a.reshape(B, C, -1, LANE)

    x = prep(inputs)
    t = prep(targets)
    M = x.shape[2]  # rows of 128 lanes per (batch, class)

    # Row-tile selection: prefer an exact multiple-of-8 tiling so the
    # boundary mask compiles out.
    if M <= TM_MAX:
        TM = M
        n_tiles = 1
    else:
        n_tiles = int(pl.cdiv(M, TM_MAX))
        TM = -(-M // n_tiles)      # ceil(M / n_tiles)
        TM = -(-TM // 8) * 8       # round up to a multiple of 8
        n_tiles = int(pl.cdiv(M, TM))
    needs_mask = (M % TM) != 0

    # Fold whole batches into one block when a single (b, c) slab is small,
    # so each grid step still moves a decent-sized DMA.
    TB = 1
    if n_tiles == 1:
        for cand in range(B, 0, -1):
            if B % cand == 0 and cand * M <= TM_MAX:
                TB = cand
                break
    n_bg = B // TB

    rows_per_block = TB * TM
    P = 8 if rows_per_block % 8 == 0 else 1   # sublane extent of the partials

    if TB > 1:
        in_blk = (TB, None, TM, LANE)         # kernel sees (TB, TM, 128)
    else:
        in_blk = (None, None, TM, LANE)       # kernel sees (TM, 128)
    in_map = lambda c, bg, ti: (bg, c, ti, 0)

    out_shape = jax.ShapeDtypeStruct((C, n_bg, P, LANE), jnp.float32)
    out_spec = pl.BlockSpec((None, None, P, LANE),
                            lambda c, bg, ti: (c, bg, 0, 0))

    n_elems = x.size
    cost = pl.CostEstimate(
        flops=4 * n_elems,
        transcendentals=0,
        bytes_accessed=x.nbytes + t.nbytes + 3 * C * n_bg * P * LANE * 4,
    )

    i_part, x_part, t_part = pl.pallas_call(
        _make_dice_partials_kernel(M, TM, needs_mask),
        out_shape=(out_shape, out_shape, out_shape),
        grid_spec=pltpu.PrefetchScalarGridSpec(
            num_scalar_prefetch=0,
            grid=(C, n_bg, n_tiles),
            in_specs=[pl.BlockSpec(in_blk, in_map),
                      pl.BlockSpec(in_blk, in_map)],
            out_specs=(out_spec, out_spec, out_spec),
        ),
        compiler_params=pltpu.CompilerParams(
            dimension_semantics=("parallel", "parallel", "arbitrary")),
        cost_estimate=cost,
    )(x, t)

    # Tiny final reduce + dice combine (per class, summed over the batch).
    inter = i_part.sum(axis=(1, 2, 3))   # (C,)
    xs = x_part.sum(axis=(1, 2, 3))
    ts = t_part.sum(axis=(1, 2, 3))
    dice = 1.0 - (2.0 * inter + smooth) / (xs + ts + smooth)
    return jnp.sum(dice)


def dice_loss_reference(inputs, targets, smooth: float = 1.0):
    """Pure-JAX reference mirroring the PyTorch module."""
    inputs = inputs.astype(jnp.float32)
    targets = targets.astype(jnp.float32)
    total = jnp.float32(0.0)
    for c in range(inputs.shape[1]):
        i = inputs[:, c].reshape(-1)
        t = targets[:, c].reshape(-1)
        inter = jnp.sum(i * t)
        total = total + (1.0 - (2.0 * inter + smooth) /
                         (jnp.sum(i) + jnp.sum(t) + smooth))
    return total


if __name__ == "__main__":
    # Small 5-D shapes consistent with DiceLoss(n_classes=6).
    B, C, D, H, W = 2, 6, 4, 16, 16
    key = jax.random.PRNGKey(0)
    k1, k2 = jax.random.split(key)
    inputs = jax.random.uniform(k1, (B, C, D, H, W), dtype=jnp.float32)
    targets = (jax.random.uniform(k2, (B, C, D, H, W)) > 0.5).astype(jnp.float32)

    loss = jax.block_until_ready(dice_loss_pallas(inputs, targets, smooth=1.0))
    ref = jax.block_until_ready(dice_loss_reference(inputs, targets, smooth=1.0))

    assert jnp.allclose(loss, ref, rtol=1e-5, atol=1e-5), (loss, ref)
    print("KERNEL_OK")
</pallas_src>

<mosaic_0001>
module attributes {stable_mosaic.version = 11 : i64} {
  func.func @kernel(%arg0: i32, %arg1: i32, %arg2: i32, %arg3: memref<2x1x8x128xf32, #tpu.memory_space<vmem>>, %arg4: memref<2x1x8x128xf32, #tpu.memory_space<vmem>>, %arg5: memref<1x1x8x128xf32, #tpu.memory_space<vmem>>, %arg6: memref<1x1x8x128xf32, #tpu.memory_space<vmem>>, %arg7: memref<1x1x8x128xf32, #tpu.memory_space<vmem>>) attributes {dimension_semantics = [#tpu.dimension_semantics<parallel>, #tpu.dimension_semantics<parallel>, #tpu.dimension_semantics<arbitrary>], iteration_bounds = array<i64: 6, 1, 1>, scalar_prefetch = 0 : i64, scratch_operands = 0 : i64, tpu.core_type = #tpu.core_type<tc>, window_params = [{transform_indices = @transform_0, window_bounds = array<i64: 2, 1, 8, 128>}, {transform_indices = @transform_1, window_bounds = array<i64: 2, 1, 8, 128>}, {transform_indices = @transform_2, window_bounds = array<i64: 1, 1, 8, 128>}, {transform_indices = @transform_3, window_bounds = array<i64: 1, 1, 8, 128>}, {transform_indices = @transform_4, window_bounds = array<i64: 1, 1, 8, 128>}]} {
    %c0_i32 = arith.constant 0 : i32
    %0 = arith.cmpi eq, %arg2, %c0_i32 : i32
    %1 = arith.extui %0 : i1 to i32
    %c0_i32_0 = arith.constant 0 : i32
    %2 = arith.cmpi ne, %1, %c0_i32_0 : i32
    scf.if %2 {
      %cst_34 = arith.constant 0.000000e+00 : f32
      %34 = vector.broadcast %cst_34 : f32 to vector<8x128xf32>
      %c0_35 = arith.constant 0 : index
      %c0_36 = arith.constant 0 : index
      %c0_37 = arith.constant 0 : index
      %c0_38 = arith.constant 0 : index
      %35 = vector.load %arg5[%c0_35, %c0_36, %c0_37, %c0_38] : memref<1x1x8x128xf32, #tpu.memory_space<vmem>>, vector<1x1x8x128xf32>
      %36 = vector.shape_cast %35 : vector<1x1x8x128xf32> to vector<8x128xf32>
      %37 = vector.shape_cast %34 : vector<8x128xf32> to vector<1x1x8x128xf32>
      tpu.vector_store %arg5[%c0_35, %c0_36, %c0_37, %c0_38], %37 {strides = array<i32>} : memref<1x1x8x128xf32, #tpu.memory_space<vmem>>, vector<1x1x8x128xf32>,
      %cst_39 = arith.constant 0.000000e+00 : f32
      %38 = vector.broadcast %cst_39 : f32 to vector<8x128xf32>
      %c0_40 = arith.constant 0 : index
      %c0_41 = arith.constant 0 : index
      %c0_42 = arith.constant 0 : index
      %c0_43 = arith.constant 0 : index
      %39 = vector.load %arg6[%c0_40, %c0_41, %c0_42, %c0_43] : memref<1x1x8x128xf32, #tpu.memory_space<vmem>>, vector<1x1x8x128xf32>
      %40 = vector.shape_cast %39 : vector<1x1x8x128xf32> to vector<8x128xf32>
      %41 = vector.shape_cast %38 : vector<8x128xf32> to vector<1x1x8x128xf32>
      tpu.vector_store %arg6[%c0_40, %c0_41, %c0_42, %c0_43], %41 {strides = array<i32>} : memref<1x1x8x128xf32, #tpu.memory_space<vmem>>, vector<1x1x8x128xf32>,
      %cst_44 = arith.constant 0.000000e+00 : f32
      %42 = vector.broadcast %cst_44 : f32 to vector<8x128xf32>
      %c0_45 = arith.constant 0 : index
      %c0_46 = arith.constant 0 : index
      %c0_47 = arith.constant 0 : index
      %c0_48 = arith.constant 0 : index
      %43 = vector.load %arg7[%c0_45, %c0_46, %c0_47, %c0_48] : memref<1x1x8x128xf32, #tpu.memory_space<vmem>>, vector<1x1x8x128xf32>
      %44 = vector.shape_cast %43 : vector<1x1x8x128xf32> to vector<8x128xf32>
      %45 = vector.shape_cast %42 : vector<8x128xf32> to vector<1x1x8x128xf32>
      tpu.vector_store %arg7[%c0_45, %c0_46, %c0_47, %c0_48], %45 {strides = array<i32>} : memref<1x1x8x128xf32, #tpu.memory_space<vmem>>, vector<1x1x8x128xf32>,
    } else {
    }
    %c0 = arith.constant 0 : index
    %c0_1 = arith.constant 0 : index
    %c0_2 = arith.constant 0 : index
    %c0_3 = arith.constant 0 : index
    %3 = vector.load %arg3[%c0, %c0_1, %c0_2, %c0_3] : memref<2x1x8x128xf32, #tpu.memory_space<vmem>>, vector<2x1x8x128xf32>
    %4 = vector.shape_cast %3 : vector<2x1x8x128xf32> to vector<2x8x128xf32>
    %5 = vector.shape_cast %4 : vector<2x8x128xf32> to vector<16x128xf32>
    %c0_4 = arith.constant 0 : index
    %c0_5 = arith.constant 0 : index
    %c0_6 = arith.constant 0 : index
    %c0_7 = arith.constant 0 : index
    %6 = vector.load %arg4[%c0_4, %c0_5, %c0_6, %c0_7] : memref<2x1x8x128xf32, #tpu.memory_space<vmem>>, vector<2x1x8x128xf32>
    %7 = vector.shape_cast %6 : vector<2x1x8x128xf32> to vector<2x8x128xf32>
    %8 = vector.shape_cast %7 : vector<2x8x128xf32> to vector<16x128xf32>
    %c0_8 = arith.constant 0 : index
    %c0_9 = arith.constant 0 : index
    %c0_10 = arith.constant 0 : index
    %c0_11 = arith.constant 0 : index
    %9 = vector.load %arg5[%c0_8, %c0_9, %c0_10, %c0_11] : memref<1x1x8x128xf32, #tpu.memory_space<vmem>>, vector<1x1x8x128xf32>
    %10 = vector.shape_cast %9 : vector<1x1x8x128xf32> to vector<8x128xf32>
    %11 = arith.mulf %5, %8 : vector<16x128xf32>
    %12 = vector.shape_cast %11 : vector<16x128xf32> to vector<2x8x128xf32>
    %cst = arith.constant dense<0.000000e+00> : vector<8x128xf32>
    %13 = vector.multi_reduction <add>, %12, %cst [0] : vector<2x8x128xf32> to vector<8x128xf32>
    %14 = arith.addf %10, %13 : vector<8x128xf32>
    %c0_12 = arith.constant 0 : index
    %c0_13 = arith.constant 0 : index
    %c0_14 = arith.constant 0 : index
    %c0_15 = arith.constant 0 : index
    %15 = vector.load %arg5[%c0_12, %c0_13, %c0_14, %c0_15] : memref<1x1x8x128xf32, #tpu.memory_space<vmem>>, vector<1x1x8x128xf32>
    %16 = vector.shape_cast %15 : vector<1x1x8x128xf32> to vector<8x128xf32>
    %17 = vector.shape_cast %14 : vector<8x128xf32> to vector<1x1x8x128xf32>
    tpu.vector_store %arg5[%c0_12, %c0_13, %c0_14, %c0_15], %17 {strides = array<i32>} : memref<1x1x8x128xf32, #tpu.memory_space<vmem>>, vector<1x1x8x128xf32>,
    %c0_16 = arith.constant 0 : index
    %c0_17 = arith.constant 0 : index
    %c0_18 = arith.constant 0 : index
    %c0_19 = arith.constant 0 : index
    %18 = vector.load %arg6[%c0_16, %c0_17, %c0_18, %c0_19] : memref<1x1x8x128xf32, #tpu.memory_space<vmem>>, vector<1x1x8x128xf32>
    %19 = vector.shape_cast %18 : vector<1x1x8x128xf32> to vector<8x128xf32>
    %20 = vector.shape_cast %5 : vector<16x128xf32> to vector<2x8x128xf32>
    %cst_20 = arith.constant dense<0.000000e+00> : vector<8x128xf32>
    %21 = vector.multi_reduction <add>, %20, %cst_20 [0] : vector<2x8x128xf32> to vector<8x128xf32>
    %22 = arith.addf %19, %21 : vector<8x128xf32>
    %c0_21 = arith.constant 0 : index
    %c0_22 = arith.constant 0 : index
    %c0_23 = arith.constant 0 : index
    %c0_24 = arith.constant 0 : index
    %23 = vector.load %arg6[%c0_21, %c0_22, %c0_23, %c0_24] : memref<1x1x8x128xf32, #tpu.memory_space<vmem>>, vector<1x1x8x128xf32>
    %24 = vector.shape_cast %23 : vector<1x1x8x128xf32> to vector<8x128xf32>
    %25 = vector.shape_cast %22 : vector<8x128xf32> to vector<1x1x8x128xf32>
    tpu.vector_store %arg6[%c0_21, %c0_22, %c0_23, %c0_24], %25 {strides = array<i32>} : memref<1x1x8x128xf32, #tpu.memory_space<vmem>>, vector<1x1x8x128xf32>,
    %c0_25 = arith.constant 0 : index
    %c0_26 = arith.constant 0 : index
    %c0_27 = arith.constant 0 : index
    %c0_28 = arith.constant 0 : index
    %26 = vector.load %arg7[%c0_25, %c0_26, %c0_27, %c0_28] : memref<1x1x8x128xf32, #tpu.memory_space<vmem>>, vector<1x1x8x128xf32>
    %27 = vector.shape_cast %26 : vector<1x1x8x128xf32> to vector<8x128xf32>
    %28 = vector.shape_cast %8 : vector<16x128xf32> to vector<2x8x128xf32>
    %cst_29 = arith.constant dense<0.000000e+00> : vector<8x128xf32>
    %29 = vector.multi_reduction <add>, %28, %cst_29 [0] : vector<2x8x128xf32> to vector<8x128xf32>
    %30 = arith.addf %27, %29 : vector<8x128xf32>
    %c0_30 = arith.constant 0 : index
    %c0_31 = arith.constant 0 : index
    %c0_32 = arith.constant 0 : index
    %c0_33 = arith.constant 0 : index
    %31 = vector.load %arg7[%c0_30, %c0_31, %c0_32, %c0_33] : memref<1x1x8x128xf32, #tpu.memory_space<vmem>>, vector<1x1x8x128xf32>
    %32 = vector.shape_cast %31 : vector<1x1x8x128xf32> to vector<8x128xf32>
    %33 = vector.shape_cast %30 : vector<8x128xf32> to vector<1x1x8x128xf32>
    tpu.vector_store %arg7[%c0_30, %c0_31, %c0_32, %c0_33], %33 {strides = array<i32>} : memref<1x1x8x128xf32, #tpu.memory_space<vmem>>, vector<1x1x8x128xf32>,
    return
  }
  func.func @transform_0(%arg0: i32, %arg1: i32, %arg2: i32) -> (i32, i32, i32, i32) {
    %c0_i32 = arith.constant 0 : i32
    %c0_i32_0 = arith.constant 0 : i32
    return %arg1, %arg0, %arg2, %c0_i32 : i32, i32, i32, i32
  }
  func.func @transform_1(%arg0: i32, %arg1: i32, %arg2: i32) -> (i32, i32, i32, i32) {
    %c0_i32 = arith.constant 0 : i32
    %c0_i32_0 = arith.constant 0 : i32
    return %arg1, %arg0, %arg2, %c0_i32 : i32, i32, i32, i32
  }
  func.func @transform_2(%arg0: i32, %arg1: i32, %arg2: i32) -> (i32, i32, i32, i32) {
    %c0_i32 = arith.constant 0 : i32
    %c0_i32_0 = arith.constant 0 : i32
    %c0_i32_1 = arith.constant 0 : i32
    return %arg0, %arg1, %c0_i32, %c0_i32_0 : i32, i32, i32, i32
  }
  func.func @transform_3(%arg0: i32, %arg1: i32, %arg2: i32) -> (i32, i32, i32, i32) {
    %c0_i32 = arith.constant 0 : i32
    %c0_i32_0 = arith.constant 0 : i32
    %c0_i32_1 = arith.constant 0 : i32
    return %arg0, %arg1, %c0_i32, %c0_i32_0 : i32, i32, i32, i32
  }
  func.func @transform_4(%arg0: i32, %arg1: i32, %arg2: i32) -> (i32, i32, i32, i32) {
    %c0_i32 = arith.constant 0 : i32
    %c0_i32_0 = arith.constant 0 : i32
    %c0_i32_1 = arith.constant 0 : i32
    return %arg0, %arg1, %c0_i32, %c0_i32_0 : i32, i32, i32, i32
  }
}

</mosaic_0001>

<llo_original>
// kernel: tpu_custom_call.1
$region0: #{tpu_custom_call.1}
  #allocation0 [shape = 'u32[]', space=smem, size = 0x4, offset = 0x4, fixed_abs, tag = 'smem constant byte address 0x4 - core index']
  #allocation1 [shape = 'u32[144,128]{1,0:T(1,128)}', space=vmem, size = 0x12000, scoped, tag = 'internal scratch']
  %s0 = inlined_call_operand.hbm [shape: f32[2,6,8,128], index: 0, kind: input, shape index: {}]
  %s1 = inlined_call_operand.hbm [shape: f32[2,6,8,128], index: 1, kind: input, shape index: {}]
  %s2 = inlined_call_operand.hbm [shape: f32[6,1,8,128], index: 2, kind: output, shape index: {0}]
  %s3 = inlined_call_operand.hbm [shape: f32[6,1,8,128], index: 3, kind: output, shape index: {1}]
  %s4 = inlined_call_operand.hbm [shape: f32[6,1,8,128], index: 4, kind: output, shape index: {2}]
  %5 = xla_tuple %s2, %s3, %s4
  %s6 = sld [smem:[#allocation0]]
  $region69: #{tpu_custom_call.1} parent=0
    _
  %s8 = ssub.s32 1, %s6
  %s9 = scalar_select 0, %s8, %s6
  $region1: #{tpu_custom_call.1} parent=0
    #allocation2 [shape = 'u8[16384]{0}', space=vmem, size = 0x4000, scoped, tag = 'input window, operand 0']
    #allocation3 [shape = 's32[2]{0}', space=sflag, size = 0x8, scoped, tag = 'scoped memory for tpu_custom_call.1']
    #allocation4 [shape = 's32[2]{0}', space=sflag, size = 0x8, scoped, tag = 'scoped memory for tpu_custom_call.1']
    #allocation5 [shape = 'u8[16384]{0}', space=vmem, size = 0x4000, scoped, tag = 'input window, operand 1']
    #allocation6 [shape = 's32[2]{0}', space=sflag, size = 0x8, scoped, tag = 'scoped memory for tpu_custom_call.1']
    #allocation7 [shape = 'u8[8192]{0}', space=vmem, size = 0x2000, scoped, tag = 'output window, operand 0']
    #allocation8 [shape = 'u8[8192]{0}', space=vmem, size = 0x2000, scoped, tag = 'output window, operand 1']
    #allocation9 [shape = 's32[2]{0}', space=sflag, size = 0x8, scoped, tag = 'scoped memory for tpu_custom_call.1']
    #allocation10 [shape = 'u8[8192]{0}', space=vmem, size = 0x2000, scoped, tag = 'output window, operand 2']
    %10 = vsyncpa [#allocation3], 0
    %s11 = scalar_lea.sflag [#allocation3], 1
    %12 = vsyncpa %s11, 0
    %13 = vsyncpa [#allocation6], 0
    %s14 = scalar_lea.sflag [#allocation6], 1
    %15 = vsyncpa %s14, 0
    %16 = vsyncpa [#allocation4], 0
    %s17 = scalar_lea.sflag [#allocation4], 1
    %18 = vsyncpa %s17, 0
    %19 = vsyncpa [#allocation9], 0
    %s20 = scalar_lea.sflag [#allocation9], 1
    %21 = vsyncpa %s20, 0
    loop: start=0, step=1, limit=8
    $region2: #{tpu_custom_call.1} parent=1 // loop_pre_header
      _
    $region3: #{tpu_custom_call.1} parent=1 // loop_header
      %s23 = sphi 0, %s27
      %p24 = scmp.ge.s32.totalorder %s23, 8
      %s30 = sphi 0, %s49
      %s31 = sphi 0, %s45
      %s32 = sphi 0, %s41
      %s33 = sphi 0, %s30
      %s34 = sphi 0, %s31
      %s35 = sphi 0, %s32
      %s36 = sphi 0, %s33
      %s37 = sphi 0, %s34
      %s38 = sphi 0, %s35
      %s56 = sphi 0, %s58
      %s59 = sphi 0, %s56
      %s60 = sphi 0, %s59
      %s76 = sphi 0, %s60
      %s86 = sphi 0, %s88
      %s89 = sphi 0, %s86
      %s90 = sphi 0, %s89
      %s106 = sphi 0, %s90
      %s114 = sphi 0, %s116
      %s117 = sphi 0, %s114
      %s118 = sphi 0, %s117
      %s134 = sphi 0, %s118
      %s142 = sphi 0, %s144
      %s145 = sphi 0, %s142
      %s146 = sphi 0, %s145
      %s162 = sphi 0, %s146
      %s170 = sphi 0, %s172
      %s173 = sphi 0, %s170
      %s174 = sphi 0, %s173
      %s190 = sphi 0, %s174
    $region4: #{tpu_custom_call.1} parent=1 // loop_header_branch
      %26 = sbr.rel (%p24) target = $region8
    $region5: #{tpu_custom_call.1} parent=1 // loop_body
      %s28 = ssub.s32 %s23, 1
      %s29 = ssub.s32 %s23, 2
      %s39 = sadd.s32 1, %s32
      %p40 = scmp.ge.s32.totalorder %s39, 1
      %s41 = scalar_select %p40, 0, %s39
      %s42 = sadd.s32 1, %s31
      %s43 = scalar_select %p40, %s42, %s31
      %p44 = scmp.ge.s32.totalorder %s43, 1
      %s45 = scalar_select %p44, 0, %s43
      %s46 = sadd.s32 1, %s30
      %s47 = scalar_select %p44, %s46, %s30
      %p48 = scmp.ge.s32.totalorder %s47, 6
      %s49 = scalar_select %p48, 0, %s47
      %s50 = ssub.s32 %s31, %s45
      %s51 = ssub.s32 %s30, %s49
      %s52 = sor.u32 %s50, %s51
      %s53 = ssub.s32 %s32, %s41
      %s54 = sor.u32 %s52, %s53
      %p55 = scmp.eq.s32.totalorder %s54, 0
      %s57 = sadd.s32 %s56, 1
      %s58 = scalar_select %p55, %s56, %s57
      %p61 = pneg %p55
      %p62 = scmp.eq.s32.totalorder %s23, 5
      %p63 = por %p61, %p62
      %p64 = scmp.ne.s32.totalorder %s56, %s59
      %p65 = scmp.eq.s32.totalorder %s23, 0
      %p66 = por %p64, %p65
      %p67 = scmp.ne.s32.totalorder %s56, %s59
      %p68 = scmp.eq.s32.totalorder %s28, 5
      %p69 = por %p67, %p68
      %p70 = scmp.ne.s32.totalorder %s59, %s60
      %p71 = scmp.eq.s32.totalorder %s28, 0
      %p72 = por %p70, %p71
      %p73 = scmp.ne.s32.totalorder %s59, %s60
      %p74 = scmp.eq.s32.totalorder %s29, 5
      %p75 = por %p73, %p74
      %p77 = scmp.ne.s32.totalorder %s60, %s76
      %p78 = scmp.eq.s32.totalorder %s29, 0
      %p79 = por %p77, %p78
      %s80 = ssub.s32 %s31, %s45
      %s81 = ssub.s32 %s30, %s49
      %s82 = sor.u32 %s80, %s81
      %s83 = ssub.s32 %s32, %s41
      %s84 = sor.u32 %s82, %s83
      %p85 = scmp.eq.s32.totalorder %s84, 0
      %s87 = sadd.s32 %s86, 1
      %s88 = scalar_select %p85, %s86, %s87
      %p91 = pneg %p85
      %p92 = scmp.eq.s32.totalorder %s23, 5
      %p93 = por %p91, %p92
      %p94 = scmp.ne.s32.totalorder %s86, %s89
      %p95 = scmp.eq.s32.totalorder %s23, 0
      %p96 = por %p94, %p95
      %p97 = scmp.ne.s32.totalorder %s86, %s89
      %p98 = scmp.eq.s32.totalorder %s28, 5
      %p99 = por %p97, %p98
      %p100 = scmp.ne.s32.totalorder %s89, %s90
      %p101 = scmp.eq.s32.totalorder %s28, 0
      %p102 = por %p100, %p101
      %p103 = scmp.ne.s32.totalorder %s89, %s90
      %p104 = scmp.eq.s32.totalorder %s29, 5
      %p105 = por %p103, %p104
      %p107 = scmp.ne.s32.totalorder %s90, %s106
      %p108 = scmp.eq.s32.totalorder %s29, 0
      %p109 = por %p107, %p108
      %s110 = ssub.s32 %s30, %s49
      %s111 = ssub.s32 %s31, %s45
      %s112 = sor.u32 %s110, %s111
      %p113 = scmp.eq.s32.totalorder %s112, 0
      %s115 = sadd.s32 %s114, 1
      %s116 = scalar_select %p113, %s114, %s115
      %p119 = pneg %p113
      %p120 = scmp.eq.s32.totalorder %s23, 5
      %p121 = por %p119, %p120
      %p122 = scmp.ne.s32.totalorder %s114, %s117
      %p123 = scmp.eq.s32.totalorder %s23, 0
      %p124 = por %p122, %p123
      %p125 = scmp.ne.s32.totalorder %s114, %s117
      %p126 = scmp.eq.s32.totalorder %s28, 5
      %p127 = por %p125, %p126
      %p128 = scmp.ne.s32.totalorder %s117, %s118
      %p129 = scmp.eq.s32.totalorder %s28, 0
      %p130 = por %p128, %p129
      %p131 = scmp.ne.s32.totalorder %s117, %s118
      %p132 = scmp.eq.s32.totalorder %s29, 5
      %p133 = por %p131, %p132
      %p135 = scmp.ne.s32.totalorder %s118, %s134
      %p136 = scmp.eq.s32.totalorder %s29, 0
      %p137 = por %p135, %p136
      %s138 = ssub.s32 %s30, %s49
      %s139 = ssub.s32 %s31, %s45
      %s140 = sor.u32 %s138, %s139
      %p141 = scmp.eq.s32.totalorder %s140, 0
      %s143 = sadd.s32 %s142, 1
      %s144 = scalar_select %p141, %s142, %s143
      %p147 = pneg %p141
      %p148 = scmp.eq.s32.totalorder %s23, 5
      %p149 = por %p147, %p148
      %p150 = scmp.ne.s32.totalorder %s142, %s145
      %p151 = scmp.eq.s32.totalorder %s23, 0
      %p152 = por %p150, %p151
      %p153 = scmp.ne.s32.totalorder %s142, %s145
      %p154 = scmp.eq.s32.totalorder %s28, 5
      %p155 = por %p153, %p154
      %p156 = scmp.ne.s32.totalorder %s145, %s146
      %p157 = scmp.eq.s32.totalorder %s28, 0
      %p158 = por %p156, %p157
      %p159 = scmp.ne.s32.totalorder %s145, %s146
      %p160 = scmp.eq.s32.totalorder %s29, 5
      %p161 = por %p159, %p160
      %p163 = scmp.ne.s32.totalorder %s146, %s162
      %p164 = scmp.eq.s32.totalorder %s29, 0
      %p165 = por %p163, %p164
      %s166 = ssub.s32 %s30, %s49
      %s167 = ssub.s32 %s31, %s45
      %s168 = sor.u32 %s166, %s167
      %p169 = scmp.eq.s32.totalorder %s168, 0
      %s171 = sadd.s32 %s170, 1
      %s172 = scalar_select %p169, %s170, %s171
      %p175 = pneg %p169
      %p176 = scmp.eq.s32.totalorder %s23, 5
      %p177 = por %p175, %p176
      %p178 = scmp.ne.s32.totalorder %s170, %s173
      %p179 = scmp.eq.s32.totalorder %s23, 0
      %p180 = por %p178, %p179
      %p181 = scmp.ne.s32.totalorder %s170, %s173
      %p182 = scmp.eq.s32.totalorder %s28, 5
      %p183 = por %p181, %p182
      %p184 = scmp.ne.s32.totalorder %s173, %s174
      %p185 = scmp.eq.s32.totalorder %s28, 0
      %p186 = por %p184, %p185
      %p187 = scmp.ne.s32.totalorder %s173, %s174
      %p188 = scmp.eq.s32.totalorder %s29, 5
      %p189 = por %p187, %p188
      %p191 = scmp.ne.s32.totalorder %s174, %s190
      %p192 = scmp.eq.s32.totalorder %s29, 0
      %p193 = por %p191, %p192
      %p194 = scmp.le.s32.totalorder 1, %s23
      %p195 = scmp.lt.s32.totalorder %s23, 7
      %p196 = pnand %p194, %p195
      %p197 = pneg %p196
      // Predicated region
      $region9: #{tpu_custom_call.1} parent=5 // pred_check
        _
      $region10: #{tpu_custom_call.1} parent=5 // pred_check_branch
        %199 = sbr.rel (%p196) target = $region12
      $region11: #{tpu_custom_call.1} parent=5 // pred_region
        %s200 = ssub.s32 %s23, 1
      $region12: #{tpu_custom_call.1} parent=5 // pred_fallthru
        _
      %p201 = scmp.lt.s32.totalorder %s23, 6
      // Predicated region
      $region13: #{tpu_custom_call.1} parent=5 // pred_check
        %p202 = pneg %p201
      $region14: #{tpu_custom_call.1} parent=5 // pred_check_branch
        %204 = sbr.rel (%p202) target = $region16
      $region15: #{tpu_custom_call.1} parent=5 // pred_region
        // Predicated region
        $region17: #{tpu_custom_call.1} parent=15 // pred_check
          %p205 = pneg %p66
        $region18: #{tpu_custom_call.1} parent=15 // pred_check_branch
          %207 = sbr.rel (%p205) target = $region20
        $region19: #{tpu_custom_call.1} parent=15 // pred_region
          %s208 = sand.u32 %s56, 1
          %s209 = scalar_lea.sflag [#allocation3], %s208
          %s210 = sand.u32 %s56, 1
          %s211 = smul.addr %s210, 16
          %s212 = scalar_lea.vmem [#allocation2], %s211
          %s213 = smul.u32 2, %s31
          %s215 = ssub.s32 256, 256
          %216 = vsyncadd %s209, %s215
          %s217 = sadd.s32 %s32, %s30
          %s218 = smul.addr %s213, 6
          %s219 = sadd.s32 %s217, %s218
          %s220 = smul.addr %s219, 128
          %s221 = scalar_lea.hbm %s0, %s220
          %s222 = sshll.u32 %s212, 4
          %s223 = int_to_ptr.vmem [resolvable:$true] %s222
          %228 = dma.hbm_to_vmem [thread:$0]  %s221, 256, %s223, %s209, 768, 128, 8
        $region20: #{tpu_custom_call.1} parent=15 // pred_fallthru
          _
        // Predicated region
        $region21: #{tpu_custom_call.1} parent=15 // pred_check
          %p229 = pneg %p96
        $region22: #{tpu_custom_call.1} parent=15 // pred_check_branch
          %231 = sbr.rel (%p229) target = $region24
        $region23: #{tpu_custom_call.1} parent=15 // pred_region
          %s232 = sand.u32 %s86, 1
          %s233 = scalar_lea.sflag [#allocation6], %s232
          %s234 = sand.u32 %s86, 1
          %s235 = smul.addr %s234, 16
          %s236 = scalar_lea.vmem [#allocation5], %s235
          %s237 = smul.u32 2, %s31
          %s239 = ssub.s32 256, 256
          %240 = vsyncadd %s233, %s239
          %s241 = sadd.s32 %s32, %s30
          %s242 = smul.addr %s237, 6
          %s243 = sadd.s32 %s241, %s242
          %s244 = smul.addr %s243, 128
          %s245 = scalar_lea.hbm %s1, %s244
          %s246 = sshll.u32 %s236, 4
          %s247 = int_to_ptr.vmem [resolvable:$true] %s246
          %252 = dma.hbm_to_vmem [thread:$0]  %s245, 256, %s247, %s233, 768, 128, 8
        $region24: #{tpu_custom_call.1} parent=15 // pred_fallthru
          _
      $region16: #{tpu_custom_call.1} parent=5 // pred_fallthru
        _
      %p253 = scmp.le.s32.totalorder 1, %s23
      %p254 = scmp.lt.s32.totalorder %s23, 7
      %p255 = pnand %p253, %p254
      %p256 = pneg %p255
      // Predicated region
      $region25: #{tpu_custom_call.1} parent=5 // pred_check
        _
      $region26: #{tpu_custom_call.1} parent=5 // pred_check_branch
        %258 = sbr.rel (%p255) target = $region28
      $region27: #{tpu_custom_call.1} parent=5 // pred_region
        %s259 = ssub.s32 %s23, 1
        %s260 = sand.u32 %s59, 1
        %s261 = scalar_lea.sflag [#allocation3], %s260
        %s262 = sand.u32 %s59, 1
        %s263 = smul.addr %s262, 16
        %s264 = scalar_lea.vmem [#allocation2], %s263
        // Predicated region
        $region29: #{tpu_custom_call.1} parent=27 // pred_check
          %p265 = pneg %p72
        $region30: #{tpu_custom_call.1} parent=27 // pred_check_branch
          %267 = sbr.rel (%p265) target = $region32
        $region31: #{tpu_custom_call.1} parent=27 // pred_region
          %268 = dma.done %s261, 256
        $region32: #{tpu_custom_call.1} parent=27 // pred_fallthru
          _
        %s269 = sand.u32 %s89, 1
        %s270 = scalar_lea.sflag [#allocation6], %s269
        %s271 = sand.u32 %s89, 1
        %s272 = smul.addr %s271, 16
        %s273 = scalar_lea.vmem [#allocation5], %s272
        // Predicated region
        $region33: #{tpu_custom_call.1} parent=27 // pred_check
          %p274 = pneg %p102
        $region34: #{tpu_custom_call.1} parent=27 // pred_check_branch
          %276 = sbr.rel (%p274) target = $region36
        $region35: #{tpu_custom_call.1} parent=27 // pred_region
          %277 = dma.done %s270, 256
        $region36: #{tpu_custom_call.1} parent=27 // pred_fallthru
          _
        %s278 = sand.u32 %s59, 1
        %s279 = scalar_lea.sflag [#allocation3], %s278
        %s280 = sand.u32 %s59, 1
        %s281 = smul.addr %s280, 16
        %s282 = scalar_lea.vmem [#allocation2], %s281
        %p283 = pneg %p72
        %p284 = pneg %p69
        %s285 = sand.u32 %s89, 1
        %s286 = scalar_lea.sflag [#allocation6], %s285
        %s287 = sand.u32 %s89, 1
        %s288 = smul.addr %s287, 16
        %s289 = scalar_lea.vmem [#allocation5], %s288
        %p290 = pneg %p102
        %p291 = pneg %p99
        %p292 = pneg %p130
        %p293 = pneg %p127
        %s294 = sand.u32 %s117, 1
        %s295 = scalar_lea.sflag [#allocation4], %s294
        %s296 = sand.u32 %s117, 1
        %s297 = smul.addr %s296, 8
        %s298 = scalar_lea.vmem [#allocation7], %s297
        %p299 = pneg %p158
        %p300 = pneg %p155
        %s301 = sand.u32 %s28, 1
        %s302 = scalar_lea.sflag [#allocation9], %s301
        %s303 = sand.u32 %s145, 1
        %s304 = smul.addr %s303, 8
        %s305 = scalar_lea.vmem [#allocation8], %s304
        %p306 = pneg %p186
        %p307 = pneg %p183
        %s308 = sand.u32 %s28, 1
        %s309 = scalar_lea.sflag [#allocation9], %s308
        %s310 = sand.u32 %s173, 1
        %s311 = smul.addr %s310, 8
        %s312 = scalar_lea.vmem [#allocation10], %s311
        %s313 = smul.u32 2, %s34
        %s314 = smul.u32 2, %s34
        %p315 = scmp.eq.s32.totalorder %s35, 0
        // Predicated region
        $region37: #{tpu_custom_call.1} parent=27 // pred_check
          %p316 = pneg %p315
        $region38: #{tpu_custom_call.1} parent=27 // pred_check_branch
          %318 = sbr.rel (%p316) target = $region40
        $region39: #{tpu_custom_call.1} parent=27 // pred_region
          %319 = vst [vmem:[%s298] sm:$0xff] 0.0
          %320 = vst [vmem:[%s305] sm:$0xff] 0.0
          %321 = vst [vmem:[%s312] sm:$0xff] 0.0
        $region40: #{tpu_custom_call.1} parent=27 // pred_fallthru
          _
        %v322 = vld [vmem:[%s264] sm:$0xff]
        %v323 = vld [vmem:[%s264 + $0x8] sm:$0xff]
        %v324 = vld [vmem:[%s273] sm:$0xff]
        %v325 = vld [vmem:[%s273 + $0x8] sm:$0xff]
        %v326 = vld [vmem:[%s298] sm:$0xff]
        %v327 = vmul.f32 %v322, %v324
        %v328 = vmul.f32 %v323, %v325
        %v329 = vadd.f32 %v327, %v328
        %v330 = vadd.f32 %v326, %v329
        %331 = vst [vmem:[%s298] sm:$0xff] %v330
        %v332 = vld [vmem:[%s305] sm:$0xff]
        %v333 = vadd.f32 %v322, %v323
        %v334 = vadd.f32 %v332, %v333
        %335 = vst [vmem:[%s305] sm:$0xff] %v334
        %v336 = vld [vmem:[%s312] sm:$0xff]
        %v337 = vadd.f32 %v324, %v325
        %v338 = vadd.f32 %v336, %v337
        %339 = vst [vmem:[%s312] sm:$0xff] %v338
        %s340 = sand.u32 %s117, 1
        %s341 = scalar_lea.sflag [#allocation4], %s340
        %s342 = sand.u32 %s117, 1
        %s343 = smul.addr %s342, 8
        %s344 = scalar_lea.vmem [#allocation7], %s343
        %s345 = sand.u32 %s28, 1
        %s346 = scalar_lea.sflag [#allocation9], %s345
        %s347 = sand.u32 %s145, 1
        %s348 = smul.addr %s347, 8
        %s349 = scalar_lea.vmem [#allocation8], %s348
        %s350 = sand.u32 %s28, 1
        %s351 = scalar_lea.sflag [#allocation9], %s350
        %s352 = sand.u32 %s173, 1
        %s353 = smul.addr %s352, 8
        %s354 = scalar_lea.vmem [#allocation10], %s353
        // Predicated region
        $region41: #{tpu_custom_call.1} parent=27 // pred_check
          %p355 = pneg %p127
        $region42: #{tpu_custom_call.1} parent=27 // pred_check_branch
          %357 = sbr.rel (%p355) target = $region44
        $region43: #{tpu_custom_call.1} parent=27 // pred_region
          %s359 = ssub.s32 128, 128
          %360 = vsyncadd %s341, %s359
          %s361 = sadd.s32 %s34, %s33
          %s362 = smul.addr %s361, 128
          %s363 = scalar_lea.hbm %s2, %s362
          %s365 = sshll.u32 %s344, 4
          %s366 = int_to_ptr.vmem [resolvable:$true] %s365
          %368 = dma.vmem_to_hbm [thread:$0]  %s366, 128, %s363, %s341
        $region44: #{tpu_custom_call.1} parent=27 // pred_fallthru
          _
        // Predicated region
        $region45: #{tpu_custom_call.1} parent=27 // pred_check
          %p369 = pneg %p155
        $region46: #{tpu_custom_call.1} parent=27 // pred_check_branch
          %371 = sbr.rel (%p369) target = $region48
        $region47: #{tpu_custom_call.1} parent=27 // pred_region
          %s373 = ssub.s32 128, 128
          %374 = vsyncadd %s346, %s373
          %s375 = sadd.s32 %s34, %s33
          %s376 = smul.addr %s375, 128
          %s377 = scalar_lea.hbm %s3, %s376
          %s379 = sshll.u32 %s349, 4
          %s380 = int_to_ptr.vmem [resolvable:$true] %s379
          %382 = dma.vmem_to_hbm [thread:$0]  %s380, 128, %s377, %s346
        $region48: #{tpu_custom_call.1} parent=27 // pred_fallthru
          _
        // Predicated region
        $region49: #{tpu_custom_call.1} parent=27 // pred_check
          %p383 = pneg %p183
        $region50: #{tpu_custom_call.1} parent=27 // pred_check_branch
          %385 = sbr.rel (%p383) target = $region52
        $region51: #{tpu_custom_call.1} parent=27 // pred_region
          %s387 = ssub.s32 128, 128
          %388 = vsyncadd %s351, %s387
          %s389 = sadd.s32 %s34, %s33
          %s390 = smul.addr %s389, 128
          %s391 = scalar_lea.hbm %s4, %s390
          %s393 = sshll.u32 %s354, 4
          %s394 = int_to_ptr.vmem [resolvable:$true] %s393
          %396 = dma.vmem_to_hbm [thread:$0]  %s394, 128, %s391, %s351
        $region52: #{tpu_custom_call.1} parent=27 // pred_fallthru
          _
      $region28: #{tpu_custom_call.1} parent=5 // pred_fallthru
        _
      %p397 = scmp.le.s32.totalorder 2, %s23
      // Predicated region
      $region53: #{tpu_custom_call.1} parent=5 // pred_check
        %p398 = pneg %p397
      $region54: #{tpu_custom_call.1} parent=5 // pred_check_branch
        %400 = sbr.rel (%p398) target = $region56
      $region55: #{tpu_custom_call.1} parent=5 // pred_region
        %s401 = ssub.s32 %s23, 2
        // Predicated region
        $region57: #{tpu_custom_call.1} parent=55 // pred_check
          %p402 = pneg %p133
        $region58: #{tpu_custom_call.1} parent=55 // pred_check_branch
          %404 = sbr.rel (%p402) target = $region60
        $region59: #{tpu_custom_call.1} parent=55 // pred_region
          %s405 = sand.u32 %s118, 1
          %s406 = scalar_lea.sflag [#allocation4], %s405
          %s407 = sand.u32 %s118, 1
          %s408 = smul.addr %s407, 8
          %s409 = scalar_lea.vmem [#allocation7], %s408
          %410 = dma.done %s406, 128
        $region60: #{tpu_custom_call.1} parent=55 // pred_fallthru
          _
        // Predicated region
        $region61: #{tpu_custom_call.1} parent=55 // pred_check
          %p411 = pneg %p161
        $region62: #{tpu_custom_call.1} parent=55 // pred_check_branch
          %413 = sbr.rel (%p411) target = $region64
        $region63: #{tpu_custom_call.1} parent=55 // pred_region
          %s414 = sand.u32 %s29, 1
          %s415 = scalar_lea.sflag [#allocation9], %s414
          %s416 = sand.u32 %s146, 1
          %s417 = smul.addr %s416, 8
          %s418 = scalar_lea.vmem [#allocation8], %s417
          %419 = dma.done %s415, 128
        $region64: #{tpu_custom_call.1} parent=55 // pred_fallthru
          _
        // Predicated region
        $region65: #{tpu_custom_call.1} parent=55 // pred_check
          %p420 = pneg %p189
        $region66: #{tpu_custom_call.1} parent=55 // pred_check_branch
          %422 = sbr.rel (%p420) target = $region68
        $region67: #{tpu_custom_call.1} parent=55 // pred_region
          %s423 = sand.u32 %s29, 1
          %s424 = scalar_lea.sflag [#allocation9], %s423
          %s425 = sand.u32 %s174, 1
          %s426 = smul.addr %s425, 8
          %s427 = scalar_lea.vmem [#allocation10], %s426
          %428 = dma.done %s424, 128
        $region68: #{tpu_custom_call.1} parent=55 // pred_fallthru
          _
      $region56: #{tpu_custom_call.1} parent=5 // pred_fallthru
        _
    $region6: #{tpu_custom_call.1} parent=1 // loop_footer
      %s27 = sadd.s32 1, %s23
    $region7: #{tpu_custom_call.1} parent=1 // loop_footer_branch
      %22 = sbr.rel target = $region3
    $region8: #{tpu_custom_call.1} parent=1 // loop_exit
      _
    %429 = vsyncpa [#allocation3], 1
    %s430 = scalar_lea.sflag [#allocation3], 1
    %431 = vsyncpa %s430, 1
    %432 = vsyncpa [#allocation6], 1
    %s433 = scalar_lea.sflag [#allocation6], 1
    %434 = vsyncpa %s433, 1
    %435 = vsyncpa [#allocation4], 1
    %s436 = scalar_lea.sflag [#allocation4], 1
    %437 = vsyncpa %s436, 1
    %438 = vsyncpa [#allocation9], 1
    %s439 = scalar_lea.sflag [#allocation9], 1
    %440 = vsyncpa %s439, 1

</llo_original>
